<compile_context>
chip_gen: v5e
topology: v5e:2x2
jax: 0.10.0
libtpu: 0.0.40
codegen_flags: <defaults>
</compile_context>

<pallas_src>
import jax
import jax.numpy as jnp
from jax import lax
from jax.experimental import pallas as pl
from jax.experimental.pallas import tpu as pltpu

_INNER_LANES = 2048          # inner sub-chunk width (bounds acc live range)
_TARGET_STEP_BYTES = 4 << 20  # aim for ~4 MiB of HBM traffic per grid step


def _norm_conv1x1_kernel(x_ref, wt_ref, b_ref, o_ref):
    # x_ref:  (bn, C,    T)  input tile  - channels on sublanes, spatial on lanes
    # wt_ref: (Cout, C)       folded conv weight (transposed), VMEM-resident
    # b_ref:  (Cout, 1)       folded bias column, VMEM-resident
    # o_ref:  (bn, Cout, T)  output tile - lane-dense (T is a multiple of 128)
    bn, c_in, t = x_ref.shape
    c_out = o_ref.shape[1]

    # Inner sub-chunk: keeps the (Cout, inner) f32 accumulator small even when
    # the BlockSpec tile (DMA granularity) is large.  The wrapper guarantees
    # t is either <= _INNER_LANES or a multiple of it.
    inner = _INNER_LANES if (t >= _INNER_LANES and t % _INNER_LANES == 0) else t
    n_chunks = t // inner

    wt = wt_ref[...]      # (Cout, C)   tiny
    bias = b_ref[...]     # (Cout, 1)

    def chunk_body(i, carry):
        off = pl.multiple_of(i * inner, 128)
        for bi in range(bn):                                       # static, small
            # In-kernel cast (free on the VPU; no wrapper-side f32 copy).
            x = x_ref[bi, :, pl.ds(off, inner)].astype(jnp.float32)   # (C, inner)
            # K = C is tiny (e.g. 4): statically-unrolled VPU broadcast-FMAs
            # instead of a near-empty MXU matmul.
            acc = wt[:, 0:1] * x[0:1, :] + bias                    # (Cout, inner)
            for c in range(1, c_in):
                acc = acc + wt[:, c:c + 1] * x[c:c + 1, :]
            o_ref[bi, :, pl.ds(off, inner)] = acc.astype(o_ref.dtype)
        return carry

    if n_chunks == 1:
        chunk_body(0, 0)
    else:
        lax.fori_loop(0, n_chunks, chunk_body, 0, unroll=n_chunks <= 8)


def normalizer_forward(x_nchw, mean, std, w, b, *,
                       block_hw=32768, out_dtype=jnp.float32):
    """Fused Normalizer + 1x1 Conv2d forward.

    x_nchw: (N, C, H, W).  mean/std: (C,).  w: (C, Cout).  b: (Cout,).
    Returns (N, Cout, H, W) in `out_dtype`, equal to
    conv1x1((x - mean) / std, w, b).
    """
    N, C, H, W = x_nchw.shape
    Cout = w.shape[1]
    HW = H * W

    # ---- Fold normalization into the conv parameters (once, O(C*Cout)) ----
    # NOTE: no epsilon on std, matching the reference semantics exactly.
    w32 = w.astype(jnp.float32)
    inv_std = 1.0 / std.astype(jnp.float32)
    wt = (w32 * inv_std[:, None]).T                                    # (Cout, C)
    b_col = (b.astype(jnp.float32)
             - (mean.astype(jnp.float32) * inv_std) @ w32).reshape(Cout, 1)

    # ---- Layout: keep NCHW; merge H,W into one contiguous lane axis (free).
    #      Input stays in its native dtype (cast happens in-kernel). ----
    x3 = x_nchw.reshape(N, C, HW)

    # ---- Spatial tile: multiple of 128 lanes; multiple of the 2048-lane inner
    #      chunk when large.  NO padding: the last block is a masked tail. ----
    t_hw = min(max(128, (int(block_hw) // 128) * 128), pl.cdiv(HW, 128) * 128)
    if t_hw >= _INNER_LANES:
        t_hw = (t_hw // _INNER_LANES) * _INNER_LANES
    n_blk = pl.cdiv(HW, t_hw)

    # ---- Batch blocking: raise bytes/grid-step for small images, but keep
    #      >= 2 total steps when possible (v7x has 2 TensorCores). ----
    in_item = jnp.dtype(x3.dtype).itemsize
    out_item = jnp.dtype(out_dtype).itemsize
    per_row_bytes = t_hw * (C * in_item + Cout * out_item)
    bn = int(max(1, min(N, _TARGET_STEP_BYTES // max(per_row_bytes, 1))))
    while N % bn:                      # keep bn a divisor of N (no ragged batch)
        bn -= 1
    while bn > 1 and pl.cdiv(N, bn) * n_blk < 2:
        bn = max(1, bn // 2)
        while N % bn:
            bn -= 1
    nb = pl.cdiv(N, bn)

    # VMEM: double-buffered in+out tiles plus headroom; capped well under the
    # 64 MiB a v7x TensorCore has (v5e/v6e have 128 MiB).
    tile_bytes = bn * t_hw * (C * in_item + Cout * out_item)
    vmem_limit = int(min(max(4 * tile_bytes + (2 << 20), 16 << 20), 48 << 20))

    out3 = pl.pallas_call(
        _norm_conv1x1_kernel,
        out_shape=jax.ShapeDtypeStruct((N, Cout, HW), out_dtype),
        grid_spec=pltpu.PrefetchScalarGridSpec(
            num_scalar_prefetch=0,
            grid=(nb, n_blk),
            in_specs=[
                pl.BlockSpec((bn, C, t_hw), lambda n, j: (n, 0, j)),   # x tile
                pl.BlockSpec((Cout, C), lambda n, j: (0, 0)),          # folded w^T
                pl.BlockSpec((Cout, 1), lambda n, j: (0, 0)),          # folded bias
            ],
            out_specs=pl.BlockSpec((bn, Cout, t_hw), lambda n, j: (n, 0, j)),
        ),
        compiler_params=pltpu.CompilerParams(
            dimension_semantics=("parallel", "parallel"),
            vmem_limit_bytes=vmem_limit,
        ),
    )(x3, wt, b_col)

    return out3.reshape(N, Cout, H, W)


def _reference(x, mean, std, w, b):
    C = x.shape[1]
    Cout = w.shape[1]
    xn = (x - mean.reshape(1, C, 1, 1)) / std.reshape(1, C, 1, 1)
    return jnp.einsum("nchw,cd->ndhw", xn, w) + b.reshape(1, Cout, 1, 1)


if __name__ == "__main__":
    N, C, H, W = 2, 4, 16, 16
    Cout = 8

    key = jax.random.PRNGKey(0)
    kx, kw, kb, kx2 = jax.random.split(key, 4)

    x = jax.random.normal(kx, (N, C, H, W), dtype=jnp.float32)

    # Deterministic per-channel normalization stats (ImageNet-style shapes).
    mean = jnp.arange(C, dtype=jnp.float32) * 0.1            # (C,)
    std = 1.0 + jnp.arange(C, dtype=jnp.float32) * 0.05      # (C,)

    # Deterministic parameters for the wrapped module (1x1 Conv2d).
    w = jax.random.normal(kw, (C, Cout), dtype=jnp.float32) * 0.1
    b = jax.random.normal(kb, (Cout,), dtype=jnp.float32) * 0.1

    # Case 1: default (large) tiles; batch-row blocking path.
    out = jax.block_until_ready(normalizer_forward(x, mean, std, w, b))
    ref = _reference(x, mean, std, w, b)
    assert out.shape == (N, Cout, H, W)
    assert jnp.allclose(out, ref, atol=1e-4, rtol=1e-4)

    # Case 2: ragged spatial size (HW not a multiple of the 128-lane tile):
    # exercises the Pallas masked-tail path (no pad / slice HBM passes).
    x2 = jax.random.normal(kx2, (3, C, 15, 9), dtype=jnp.float32)
    out2 = jax.block_until_ready(
        normalizer_forward(x2, mean, std, w, b, block_hw=128))
    ref2 = _reference(x2, mean, std, w, b)
    assert out2.shape == (3, Cout, 15, 9)
    assert jnp.allclose(out2, ref2, atol=1e-4, rtol=1e-4)

    print("KERNEL_OK")
</pallas_src>

<mosaic_0001>
module attributes {stable_mosaic.version = 11 : i64} {
  func.func @_norm_conv1x1_kernel(%arg0: i32, %arg1: i32, %arg2: memref<1x4x256xf32, #tpu.memory_space<vmem>>, %arg3: memref<8x4xf32, #tpu.memory_space<vmem>>, %arg4: memref<8x1xf32, #tpu.memory_space<vmem>>, %arg5: memref<1x8x256xf32, #tpu.memory_space<vmem>>) attributes {dimension_semantics = [#tpu.dimension_semantics<parallel>, #tpu.dimension_semantics<parallel>], iteration_bounds = array<i64: 2, 1>, scalar_prefetch = 0 : i64, scratch_operands = 0 : i64, tpu.core_type = #tpu.core_type<tc>, window_params = [{transform_indices = @transform_0, window_bounds = array<i64: 1, 4, 256>}, {pipeline_mode = #tpu.pipeline_mode<synchronous>, transform_indices = @transform_1, window_bounds = array<i64: 8, 4>}, {pipeline_mode = #tpu.pipeline_mode<synchronous>, transform_indices = @transform_2, window_bounds = array<i64: 8, 1>}, {transform_indices = @transform_3, window_bounds = array<i64: 1, 8, 256>}]} {
    %c0 = arith.constant 0 : index
    %c0_0 = arith.constant 0 : index
    %0 = vector.load %arg3[%c0, %c0_0] : memref<8x4xf32, #tpu.memory_space<vmem>>, vector<8x4xf32>
    %c0_1 = arith.constant 0 : index
    %c0_2 = arith.constant 0 : index
    %1 = vector.load %arg4[%c0_1, %c0_2] : memref<8x1xf32, #tpu.memory_space<vmem>>, vector<8x1xf32>
    %c0_i32 = arith.constant 0 : i32
    %2 = tpu.assume_multiple %c0_i32, 128 : i32
    %c0_3 = arith.constant 0 : index
    %c0_4 = arith.constant 0 : index
    %3 = arith.index_cast %2 : i32 to index
    %4 = vector.load %arg2[%c0_3, %c0_4, %3] : memref<1x4x256xf32, #tpu.memory_space<vmem>>, vector<1x4x256xf32>
    %5 = vector.shape_cast %4 : vector<1x4x256xf32> to vector<4x256xf32>
    %6 = vector.extract_strided_slice %0 {offsets = [0, 0], sizes = [8, 1], strides = [1, 1]} : vector<8x4xf32> to vector<8x1xf32>
    %7 = vector.extract_strided_slice %5 {offsets = [0, 0], sizes = [1, 256], strides = [1, 1]} : vector<4x256xf32> to vector<1x256xf32>
    %8 = vector.broadcast %6 : vector<8x1xf32> to vector<8x256xf32>
    %9 = vector.broadcast %7 : vector<1x256xf32> to vector<8x256xf32>
    %10 = arith.mulf %8, %9 : vector<8x256xf32>
    %11 = vector.broadcast %1 : vector<8x1xf32> to vector<8x256xf32>
    %12 = arith.addf %10, %11 : vector<8x256xf32>
    %13 = vector.extract_strided_slice %0 {offsets = [0, 1], sizes = [8, 1], strides = [1, 1]} : vector<8x4xf32> to vector<8x1xf32>
    %14 = vector.extract_strided_slice %5 {offsets = [1, 0], sizes = [1, 256], strides = [1, 1]} : vector<4x256xf32> to vector<1x256xf32>
    %15 = vector.broadcast %13 : vector<8x1xf32> to vector<8x256xf32>
    %16 = vector.broadcast %14 : vector<1x256xf32> to vector<8x256xf32>
    %17 = arith.mulf %15, %16 : vector<8x256xf32>
    %18 = arith.addf %12, %17 : vector<8x256xf32>
    %19 = vector.extract_strided_slice %0 {offsets = [0, 2], sizes = [8, 1], strides = [1, 1]} : vector<8x4xf32> to vector<8x1xf32>
    %20 = vector.extract_strided_slice %5 {offsets = [2, 0], sizes = [1, 256], strides = [1, 1]} : vector<4x256xf32> to vector<1x256xf32>
    %21 = vector.broadcast %19 : vector<8x1xf32> to vector<8x256xf32>
    %22 = vector.broadcast %20 : vector<1x256xf32> to vector<8x256xf32>
    %23 = arith.mulf %21, %22 : vector<8x256xf32>
    %24 = arith.addf %18, %23 : vector<8x256xf32>
    %25 = vector.extract_strided_slice %0 {offsets = [0, 3], sizes = [8, 1], strides = [1, 1]} : vector<8x4xf32> to vector<8x1xf32>
    %26 = vector.extract_strided_slice %5 {offsets = [3, 0], sizes = [1, 256], strides = [1, 1]} : vector<4x256xf32> to vector<1x256xf32>
    %27 = vector.broadcast %25 : vector<8x1xf32> to vector<8x256xf32>
    %28 = vector.broadcast %26 : vector<1x256xf32> to vector<8x256xf32>
    %29 = arith.mulf %27, %28 : vector<8x256xf32>
    %30 = arith.addf %24, %29 : vector<8x256xf32>
    %c0_5 = arith.constant 0 : index
    %c0_6 = arith.constant 0 : index
    %31 = arith.index_cast %2 : i32 to index
    %32 = vector.load %arg5[%c0_5, %c0_6, %31] : memref<1x8x256xf32, #tpu.memory_space<vmem>>, vector<1x8x256xf32>
    %33 = vector.shape_cast %32 : vector<1x8x256xf32> to vector<8x256xf32>
    %34 = vector.shape_cast %30 : vector<8x256xf32> to vector<1x8x256xf32>
    tpu.vector_store %arg5[%c0_5, %c0_6, %31], %34 {strides = array<i32>} : memref<1x8x256xf32, #tpu.memory_space<vmem>>, vector<1x8x256xf32>,
    return
  }
  func.func @transform_0(%arg0: i32, %arg1: i32) -> (i32, i32, i32) {
    %c0_i32 = arith.constant 0 : i32
    %c0_i32_0 = arith.constant 0 : i32
    return %arg0, %c0_i32, %arg1 : i32, i32, i32
  }
  func.func @transform_1(%arg0: i32, %arg1: i32) -> (i32, i32) {
    %c0_i32 = arith.constant 0 : i32
    %c0_i32_0 = arith.constant 0 : i32
    %c0_i32_1 = arith.constant 0 : i32
    return %c0_i32, %c0_i32_0 : i32, i32
  }
  func.func @transform_2(%arg0: i32, %arg1: i32) -> (i32, i32) {
    %c0_i32 = arith.constant 0 : i32
    %c0_i32_0 = arith.constant 0 : i32
    %c0_i32_1 = arith.constant 0 : i32
    return %c0_i32, %c0_i32_0 : i32, i32
  }
  func.func @transform_3(%arg0: i32, %arg1: i32) -> (i32, i32, i32) {
    %c0_i32 = arith.constant 0 : i32
    %c0_i32_0 = arith.constant 0 : i32
    return %arg0, %c0_i32, %arg1 : i32, i32, i32
  }
}

</mosaic_0001>

<llo_original>
// kernel: tpu_custom_call.1
$region0: #{tpu_custom_call.1}
  #allocation0 [shape = 'u32[]', space=smem, size = 0x4, offset = 0x4, fixed_abs, tag = 'smem constant byte address 0x4 - core index']
  #allocation1 [shape = 'u32[72,128]{1,0:T(1,128)}', space=vmem, size = 0x9000, scoped, tag = 'internal scratch']
  %s0 = inlined_call_operand.vmem [shape: f32[2,4,256], index: 0, kind: input, shape index: {}]
  %s1 = inlined_call_operand.vmem [shape: f32[8,4], index: 1, kind: input, shape index: {}]
  %s2 = inlined_call_operand.vmem [shape: f32[8,1], index: 2, kind: input, shape index: {}]
  %s3 = inlined_call_operand.hbm [shape: f32[2,8,256], index: 3, kind: output, shape index: {}]
  %s4 = sld [smem:[#allocation0]]
  $region45: #{tpu_custom_call.1} parent=0
    _
  %s6 = ssub.s32 1, %s4
  %s7 = scalar_select 0, %s6, %s4
  $region1: #{tpu_custom_call.1} parent=0
    #allocation2 [shape = 'u8[16384]{0}', space=vmem, size = 0x4000, scoped, tag = 'output window, operand 0']
    #allocation3 [shape = 's32[2]{0}', space=sflag, size = 0x8, scoped, tag = 'scoped memory for tpu_custom_call.1']
    %8 = vsyncpa [#allocation3], 0
    %s9 = scalar_lea.sflag [#allocation3], 1
    %10 = vsyncpa %s9, 0
    loop: start=0, step=1, limit=4
    $region2: #{tpu_custom_call.1} parent=1 // loop_pre_header
      _
    $region3: #{tpu_custom_call.1} parent=1 // loop_header
      %s12 = sphi 0, %s16
      %p13 = scmp.ge.s32.totalorder %s12, 4
      %s19 = sphi 0, %s31
      %s20 = sphi 0, %s27
      %s21 = sphi 0, %s19
      %s22 = sphi 0, %s20
      %s23 = sphi 0, %s21
      %s24 = sphi 0, %s22
      %s36 = sphi 0, %s38
      %s39 = sphi 0, %s36
      %s40 = sphi 0, %s39
      %s56 = sphi 0, %s40
      %s60 = sphi 0, %s60
      %s62 = sphi 0, %s60
      %s63 = sphi 0, %s62
      %s77 = sphi 0, %s63
      %s81 = sphi 0, %s81
      %s83 = sphi 0, %s81
      %s84 = sphi 0, %s83
      %s98 = sphi 0, %s84
      %s106 = sphi 0, %s108
      %s109 = sphi 0, %s106
      %s110 = sphi 0, %s109
      %s126 = sphi 0, %s110
    $region4: #{tpu_custom_call.1} parent=1 // loop_header_branch
      %15 = sbr.rel (%p13) target = $region8
    $region5: #{tpu_custom_call.1} parent=1 // loop_body
      %s17 = ssub.s32 %s12, 1
      %s18 = ssub.s32 %s12, 2
      %s25 = sadd.s32 1, %s20
      %p26 = scmp.ge.s32.totalorder %s25, 1
      %s27 = scalar_select %p26, 0, %s25
      %s28 = sadd.s32 1, %s19
      %s29 = scalar_select %p26, %s28, %s19
      %p30 = scmp.ge.s32.totalorder %s29, 2
      %s31 = scalar_select %p30, 0, %s29
      %s32 = ssub.s32 %s19, %s31
      %s33 = ssub.s32 %s20, %s27
      %s34 = sor.u32 %s32, %s33
      %p35 = scmp.eq.s32.totalorder %s34, 0
      %s37 = sadd.s32 %s36, 1
      %s38 = scalar_select %p35, %s36, %s37
      %p41 = pneg %p35
      %p42 = scmp.eq.s32.totalorder %s12, 1
      %p43 = por %p41, %p42
      %p44 = scmp.ne.s32.totalorder %s36, %s39
      %p45 = scmp.eq.s32.totalorder %s12, 0
      %p46 = por %p44, %p45
      %p47 = scmp.ne.s32.totalorder %s36, %s39
      %p48 = scmp.eq.s32.totalorder %s17, 1
      %p49 = por %p47, %p48
      %p50 = scmp.ne.s32.totalorder %s39, %s40
      %p51 = scmp.eq.s32.totalorder %s17, 0
      %p52 = por %p50, %p51
      %p53 = scmp.ne.s32.totalorder %s39, %s40
      %p54 = scmp.eq.s32.totalorder %s18, 1
      %p55 = por %p53, %p54
      %p57 = scmp.ne.s32.totalorder %s40, %s56
      %p58 = scmp.eq.s32.totalorder %s18, 0
      %p59 = por %p57, %p58
      %s61 = sadd.s32 %s60, 1
      %p64 = scmp.eq.s32.totalorder %s12, 1
      %p65 = scmp.ne.s32.totalorder %s60, %s62
      %p66 = scmp.eq.s32.totalorder %s12, 0
      %p67 = por %p65, %p66
      %p68 = scmp.ne.s32.totalorder %s60, %s62
      %p69 = scmp.eq.s32.totalorder %s17, 1
      %p70 = por %p68, %p69
      %p71 = scmp.ne.s32.totalorder %s62, %s63
      %p72 = scmp.eq.s32.totalorder %s17, 0
      %p73 = por %p71, %p72
      %p74 = scmp.ne.s32.totalorder %s62, %s63
      %p75 = scmp.eq.s32.totalorder %s18, 1
      %p76 = por %p74, %p75
      %p78 = scmp.ne.s32.totalorder %s63, %s77
      %p79 = scmp.eq.s32.totalorder %s18, 0
      %p80 = por %p78, %p79
      %s82 = sadd.s32 %s81, 1
      %p85 = scmp.eq.s32.totalorder %s12, 1
      %p86 = scmp.ne.s32.totalorder %s81, %s83
      %p87 = scmp.eq.s32.totalorder %s12, 0
      %p88 = por %p86, %p87
      %p89 = scmp.ne.s32.totalorder %s81, %s83
      %p90 = scmp.eq.s32.totalorder %s17, 1
      %p91 = por %p89, %p90
      %p92 = scmp.ne.s32.totalorder %s83, %s84
      %p93 = scmp.eq.s32.totalorder %s17, 0
      %p94 = por %p92, %p93
      %p95 = scmp.ne.s32.totalorder %s83, %s84
      %p96 = scmp.eq.s32.totalorder %s18, 1
      %p97 = por %p95, %p96
      %p99 = scmp.ne.s32.totalorder %s84, %s98
      %p100 = scmp.eq.s32.totalorder %s18, 0
      %p101 = por %p99, %p100
      %s102 = ssub.s32 %s19, %s31
      %s103 = ssub.s32 %s20, %s27
      %s104 = sor.u32 %s102, %s103
      %p105 = scmp.eq.s32.totalorder %s104, 0
      %s107 = sadd.s32 %s106, 1
      %s108 = scalar_select %p105, %s106, %s107
      %p111 = pneg %p105
      %p112 = scmp.eq.s32.totalorder %s12, 1
      %p113 = por %p111, %p112
      %p114 = scmp.ne.s32.totalorder %s106, %s109
      %p115 = scmp.eq.s32.totalorder %s12, 0
      %p116 = por %p114, %p115
      %p117 = scmp.ne.s32.totalorder %s106, %s109
      %p118 = scmp.eq.s32.totalorder %s17, 1
      %p119 = por %p117, %p118
      %p120 = scmp.ne.s32.totalorder %s109, %s110
      %p121 = scmp.eq.s32.totalorder %s17, 0
      %p122 = por %p120, %p121
      %p123 = scmp.ne.s32.totalorder %s109, %s110
      %p124 = scmp.eq.s32.totalorder %s18, 1
      %p125 = por %p123, %p124
      %p127 = scmp.ne.s32.totalorder %s110, %s126
      %p128 = scmp.eq.s32.totalorder %s18, 0
      %p129 = por %p127, %p128
      %p130 = scmp.le.s32.totalorder 1, %s12
      %p131 = scmp.lt.s32.totalorder %s12, 3
      %p132 = pnand %p130, %p131
      %p133 = pneg %p132
      // Predicated region
      $region9: #{tpu_custom_call.1} parent=5 // pred_check
        _
      $region10: #{tpu_custom_call.1} parent=5 // pred_check_branch
        %135 = sbr.rel (%p132) target = $region12
      $region11: #{tpu_custom_call.1} parent=5 // pred_region
        %s136 = ssub.s32 %s12, 1
        // Predicated region
        $region13: #{tpu_custom_call.1} parent=11 // pred_check
          %p137 = pneg %p73
        $region14: #{tpu_custom_call.1} parent=11 // pred_check_branch
          %139 = sbr.rel (%p137) target = $region16
        $region15: #{tpu_custom_call.1} parent=11 // pred_region
          _
        $region16: #{tpu_custom_call.1} parent=11 // pred_fallthru
          _
        // Predicated region
        $region17: #{tpu_custom_call.1} parent=11 // pred_check
          %p140 = pneg %p94
        $region18: #{tpu_custom_call.1} parent=11 // pred_check_branch
          %142 = sbr.rel (%p140) target = $region20
        $region19: #{tpu_custom_call.1} parent=11 // pred_region
          _
        $region20: #{tpu_custom_call.1} parent=11 // pred_fallthru
          _
      $region12: #{tpu_custom_call.1} parent=5 // pred_fallthru
        _
      %p143 = scmp.lt.s32.totalorder %s12, 2
      // Predicated region
      $region21: #{tpu_custom_call.1} parent=5 // pred_check
        %p144 = pneg %p143
      $region22: #{tpu_custom_call.1} parent=5 // pred_check_branch
        %146 = sbr.rel (%p144) target = $region24
      $region23: #{tpu_custom_call.1} parent=5 // pred_region
        // Predicated region
        $region25: #{tpu_custom_call.1} parent=23 // pred_check
          %p147 = pneg %p46
        $region26: #{tpu_custom_call.1} parent=23 // pred_check_branch
          %149 = sbr.rel (%p147) target = $region28
        $region27: #{tpu_custom_call.1} parent=23 // pred_region
          %s150 = smul.u32 2, %s20
          %p151 = scmp.lt.s32.totalorder %s19, 1
          %s152 = scalar_select %p151, %s19, 1
          %p153 = scmp.lt.s32.totalorder %s150, 1
          %s154 = scalar_select %p153, %s150, 1
          %s155 = smul.addr %s152, 2
          %s156 = sadd.s32 %s154, %s155
          %s157 = smul.addr %s156, 4
          %s158 = scalar_lea.vmem %s0, %s157
          %s159 = smul.u32 2, %s20
        $region28: #{tpu_custom_call.1} parent=23 // pred_fallthru
          _
      $region24: #{tpu_custom_call.1} parent=5 // pred_fallthru
        _
      %p160 = scmp.le.s32.totalorder 1, %s12
      %p161 = scmp.lt.s32.totalorder %s12, 3
      %p162 = pnand %p160, %p161
      %p163 = pneg %p162
      // Predicated region
      $region29: #{tpu_custom_call.1} parent=5 // pred_check
        _
      $region30: #{tpu_custom_call.1} parent=5 // pred_check_branch
        %165 = sbr.rel (%p162) target = $region32
      $region31: #{tpu_custom_call.1} parent=5 // pred_region
        %s166 = ssub.s32 %s12, 1
        %s167 = smul.u32 2, %s22
        %p168 = scmp.lt.s32.totalorder %s21, 1
        %s169 = scalar_select %p168, %s21, 1
        %p170 = scmp.lt.s32.totalorder %s167, 1
        %s171 = scalar_select %p170, %s167, 1
        %s172 = smul.addr %s169, 2
        %s173 = sadd.s32 %s171, %s172
        %s174 = smul.addr %s173, 4
        %s175 = scalar_lea.vmem %s0, %s174
        %p176 = pneg %p52
        %p177 = pneg %p49
        %p178 = pneg %p73
        %p179 = pneg %p70
        %p180 = pneg %p94
        %p181 = pneg %p91
        %p182 = pneg %p122
        %p183 = pneg %p119
        %s184 = sand.u32 %s109, 1
        %s185 = scalar_lea.sflag [#allocation3], %s184
        %s186 = sand.u32 %s109, 1
        %s187 = smul.addr %s186, 16
        %s188 = scalar_lea.vmem [#allocation2], %s187
        %s189 = smul.u32 2, %s22
        %p190 = scmp.lt.s32.totalorder %s21, 1
        %s191 = scalar_select %p190, %s21, 1
        %p192 = scmp.lt.s32.totalorder %s189, 1
        %s193 = scalar_select %p192, %s189, 1
        %s194 = smul.addr %s191, 2
        %s195 = sadd.s32 %s193, %s194
        %s196 = smul.addr %s195, 4
        %s197 = scalar_lea.vmem %s0, %s196
        %s198 = smul.u32 2, %s22
        %s199 = smul.u32 2, %s22
        %v200 = vld [vmem:[%s1] sm:$0xff]
        %v201 = vld [vmem:[%s2] sm:$0xff]
        %v202 = vld [vmem:[%s197] sm:$0xff]
        %204 = vset.pattern.permute.xlu0 0
        %205 = vperm.xlu0 %204, %v200
        %v206 = vpop.permute.xlu0 %205
        %v209 = vperm.slane %v202, 0
        %v210 = vperm.slane %v202, 4
        %v213 = vperm.slane %v209, 0
        %v214 = vperm.slane %v210, 0
        %v215 = vmul.f32 %v206, %v213
        %v216 = vmul.f32 %v206, %v214
        %218 = vset.pattern.permute.xlu0 0
        %219 = vperm.xlu0 %218, %v201
        %v220 = vpop.permute.xlu0 %219
        %v222 = vadd.f32 %v215, %v220
        %v223 = vadd.f32 %v216, %v220
        %224 = vset.pattern.permute.xlu0 1
        %225 = vperm.xlu0 %224, %v200
        %v226 = vpop.permute.xlu0 %225
        %v228 = vperm.slane %v202, 1
        %v229 = vperm.slane %v202, 5
        %v232 = vperm.slane %v228, 1
        %v233 = vperm.slane %v229, 1
        %v234 = vmul.f32 %v226, %v232
        %v235 = vmul.f32 %v226, %v233
        %v236 = vadd.f32 %v222, %v234
        %v237 = vadd.f32 %v223, %v235
        %238 = vset.pattern.permute.xlu0 2
        %239 = vperm.xlu0 %238, %v200
        %v240 = vpop.permute.xlu0 %239
        %v242 = vperm.slane %v202, 2
        %v243 = vperm.slane %v202, 6
        %v246 = vperm.slane %v242, 2
        %v247 = vperm.slane %v243, 2
        %v248 = vmul.f32 %v240, %v246
        %v249 = vmul.f32 %v240, %v247
        %v250 = vadd.f32 %v236, %v248
        %v251 = vadd.f32 %v237, %v249
        %252 = vset.pattern.permute.xlu0 3
        %253 = vperm.xlu0 %252, %v200
        %v254 = vpop.permute.xlu0 %253
        %v256 = vperm.slane %v202, 3
        %v257 = vperm.slane %v202, 7
        %v260 = vperm.slane %v256, 3
        %v261 = vperm.slane %v257, 3
        %v262 = vmul.f32 %v254, %v260
        %v263 = vmul.f32 %v254, %v261
        %v264 = vadd.f32 %v250, %v262
        %v265 = vadd.f32 %v251, %v263
        %266 = vst [vmem:[%s188] sm:$0xff] %v264
        %267 = vst [vmem:[%s188 + $0x8] sm:$0xff] %v265
        %s268 = sand.u32 %s109, 1
        %s269 = scalar_lea.sflag [#allocation3], %s268
        %s270 = sand.u32 %s109, 1
        %s271 = smul.addr %s270, 16
        %s272 = scalar_lea.vmem [#allocation2], %s271
        // Predicated region
        $region33: #{tpu_custom_call.1} parent=31 // pred_check
          %p273 = pneg %p119
        $region34: #{tpu_custom_call.1} parent=31 // pred_check_branch
          %275 = sbr.rel (%p273) target = $region36
        $region35: #{tpu_custom_call.1} parent=31 // pred_region
          %s276 = smul.u32 2, %s22
          %278 = vsyncadd %s269, 0
          %s279 = smul.addr %s21, 2
          %s280 = sadd.s32 %s276, %s279
          %s281 = smul.addr %s280, 8
          %s282 = scalar_lea.hbm %s3, %s281
          %s284 = sshll.u32 %s272, 4
          %s285 = int_to_ptr.vmem [resolvable:$true] %s284
          %s286 = sshll.u32 %s282, 4
          %s287 = int_to_ptr.hbm [resolvable:$true] %s286
          %289 = dma.vmem_to_hbm [thread:$0]  %s285, 256, %s287, %s269
        $region36: #{tpu_custom_call.1} parent=31 // pred_fallthru
          _
      $region32: #{tpu_custom_call.1} parent=5 // pred_fallthru
        _
      %p290 = scmp.le.s32.totalorder 2, %s12
      // Predicated region
      $region37: #{tpu_custom_call.1} parent=5 // pred_check
        %p291 = pneg %p290
      $region38: #{tpu_custom_call.1} parent=5 // pred_check_branch
        %293 = sbr.rel (%p291) target = $region40
      $region39: #{tpu_custom_call.1} parent=5 // pred_region
        %s294 = ssub.s32 %s12, 2
        // Predicated region
        $region41: #{tpu_custom_call.1} parent=39 // pred_check
          %p295 = pneg %p125
        $region42: #{tpu_custom_call.1} parent=39 // pred_check_branch
          %297 = sbr.rel (%p295) target = $region44
        $region43: #{tpu_custom_call.1} parent=39 // pred_region
          %s298 = sand.u32 %s110, 1
          %s299 = scalar_lea.sflag [#allocation3], %s298
          %s300 = sand.u32 %s110, 1
          %s301 = smul.addr %s300, 16
          %s302 = scalar_lea.vmem [#allocation2], %s301
          %304 = dma.done %s299, 256
        $region44: #{tpu_custom_call.1} parent=39 // pred_fallthru
          _
      $region40: #{tpu_custom_call.1} parent=5 // pred_fallthru
        _
    $region6: #{tpu_custom_call.1} parent=1 // loop_footer
      %s16 = sadd.s32 1, %s12
    $region7: #{tpu_custom_call.1} parent=1 // loop_footer_branch
      %11 = sbr.rel target = $region3
    $region8: #{tpu_custom_call.1} parent=1 // loop_exit
      _
    %305 = vsyncpa [#allocation3], 1
    %s306 = scalar_lea.sflag [#allocation3], 1
    %307 = vsyncpa %s306, 1

</llo_original>
